<compile_context>
chip_gen: v7x
topology: tpu7x:2x2x1
jax: 0.10.0
libtpu: 0.0.40
codegen_flags: <defaults>
</compile_context>

<pallas_src>
import jax
import jax.numpy as jnp
from jax.experimental import pallas as pl
from jax.experimental.pallas import tpu as pltpu

# ------------------------- "config" (small, synthetic) -----------------------
RESNET_OUT_FEATURE_DIM = 128   # config.resnet_out_feature_dim
KEYPOINT_NUM = 21              # config.keypoint_num  (-> 42 output values)

B, C, H, W = 2, 4, 16, 16      # NCHW input, consistent with the forward()

TB = 8                         # batch tile (sublane-aligned)
PAD_N = 128                    # lane-dense width used for every layer


# ------------------------------ slab layout ----------------------------------
def _slab_layout(chw):
    """Static row offsets of each packed parameter inside the (N_ROWS, 128) slab."""
    offs = {}
    r = 0
    offs["w0"] = (r, chw); r += chw          # expanded pool+proj weight
    offs["b0"] = (r, TB); r += TB            # bias, replicated TB rows
    for i in range(1, 6):
        offs[f"w{i}"] = (r, PAD_N); r += PAD_N
        offs[f"b{i}"] = (r, TB); r += TB
    offs["scale"] = (r, TB); r += TB         # [w, h, w, h, ...] row, replicated
    return offs, r                           # r is a multiple of 8


# --------------------------------- kernel ------------------------------------
def _make_kernel(offs):
    def kernel(img_ref, p_ref, out_ref):
        # img_ref: (TB, C*H*W)   p_ref: (N_ROWS, 128)   out_ref: (TB, 128)
        def blk(name):
            r, n = offs[name]
            return p_ref[r:r + n, :]         # static slice -> zero-cost view

        # backbone stand-in: mean-pool + Linear folded into one matmul
        x = jnp.dot(img_ref[...], blk("w0"),
                    preferred_element_type=jnp.float32) + blk("b0")
        # 4x (Linear + ReLU), all lane-dense 128-wide
        for i in range(1, 5):
            x = jnp.maximum(
                jnp.dot(x, blk(f"w{i}"), preferred_element_type=jnp.float32)
                + blk(f"b{i}"), 0.0)
        # final Linear + Sigmoid (exp + approx-reciprocal -> EUP)
        logits = jnp.dot(x, blk("w5"),
                         preferred_element_type=jnp.float32) + blk("b5")
        pose = pl.reciprocal(1.0 + jnp.exp(-logits), approx=True)
        # pose.view(b,-1,2); u*W, v*H  ==  multiply by [W, H, W, H, ...]
        out_ref[...] = pose * blk("scale")
    return kernel


# ------------------------------ param packing --------------------------------
def pack_params(params, c, h, w):
    """Pack all weights/biases + the uv scale into one lane-dense f32 slab."""
    hw = h * w
    chw = c * hw
    k2 = KEYPOINT_NUM * 2
    offs, n_rows = _slab_layout(chw)

    def col_pad(a):
        return jnp.pad(a, ((0, 0), (0, PAD_N - a.shape[1])))

    blocks = []
    # fold 1/(H*W) and the spatial pool into the projection weight
    w0exp = jnp.repeat(params["w0"].astype(jnp.float32) / float(hw), hw, axis=0)
    blocks.append(w0exp)                                         # (chw, 128)
    blocks.append(jnp.tile(col_pad(params["b0"]), (TB, 1)))      # (TB, 128)
    for i in range(1, 6):
        wi = col_pad(params[f"w{i}"])                            # (fan_in, 128)
        wi = jnp.pad(wi, ((0, PAD_N - wi.shape[0]), (0, 0)))     # (128, 128)
        blocks.append(wi)
        blocks.append(jnp.tile(col_pad(params[f"b{i}"]), (TB, 1)))
    scale = jnp.tile(jnp.array([float(w), float(h)], jnp.float32), KEYPOINT_NUM)
    scale = jnp.pad(scale, (0, PAD_N - k2)).reshape(1, PAD_N)
    blocks.append(jnp.tile(scale, (TB, 1)))

    slab = jnp.concatenate(blocks, axis=0).astype(jnp.float32)
    assert slab.shape == (n_rows, PAD_N)
    return slab


# --------------------------------- wrapper ------------------------------------
def twodim_handpose_forward(img, packed_params):
    """img: (B, C, H, W) float32 NCHW.  Returns the PyTorch-style tuple."""
    b, c, h, w = img.shape
    chw = c * h * w
    k2 = KEYPOINT_NUM * 2
    offs, n_rows = _slab_layout(chw)
    assert packed_params.shape == (n_rows, PAD_N)

    bp = ((b + TB - 1) // TB) * TB
    img_flat = img.reshape(b, chw).astype(jnp.float32)
    if bp != b:
        img_flat = jnp.pad(img_flat, ((0, bp - b), (0, 0)))

    flops = 2 * bp * (chw * PAD_N + 5 * PAD_N * PAD_N)
    bytes_accessed = (bp * chw + n_rows * PAD_N + bp * PAD_N) * 4
    cost = pl.CostEstimate(flops=flops,
                           transcendentals=2 * bp * PAD_N,
                           bytes_accessed=bytes_accessed)

    out = pl.pallas_call(
        _make_kernel(offs),
        out_shape=jax.ShapeDtypeStruct((bp, PAD_N), jnp.float32),
        grid=(bp // TB,),
        in_specs=[pl.BlockSpec((TB, chw), lambda i: (i, 0)),      # image tile
                  pl.BlockSpec((n_rows, PAD_N), lambda i: (0, 0))],  # resident slab
        out_specs=pl.BlockSpec((TB, PAD_N), lambda i: (i, 0)),
        compiler_params=pltpu.CompilerParams(
            dimension_semantics=("parallel",)),
        cost_estimate=cost,
    )(img_flat, packed_params)

    keypoint_uv21 = out[:b, :k2].reshape(b, KEYPOINT_NUM, 2)
    refined_joint_coord = [None, keypoint_uv21, None]
    diffusion_loss = jnp.asarray(0, jnp.int32)   # mirrors torch.tensor(0)
    return refined_joint_coord, diffusion_loss, [None, None]


# ------------------------ deterministic parameter init ------------------------
def init_params(key):
    d = RESNET_OUT_FEATURE_DIM
    dims = [(C, d),
            (d, d // 2),
            (d // 2, d // 4),
            (d // 4, d // 8),
            (d // 8, d // 16),
            (d // 16, KEYPOINT_NUM * 2)]
    params = {}
    for i, (fan_in, fan_out) in enumerate(dims):
        key, kw, kb = jax.random.split(key, 3)
        bound = 1.0 / jnp.sqrt(float(fan_in))
        params[f"w{i}"] = jax.random.uniform(kw, (fan_in, fan_out), jnp.float32,
                                             -bound, bound)
        params[f"b{i}"] = jax.random.uniform(kb, (1, fan_out), jnp.float32,
                                             -bound, bound)
    return params


if __name__ == "__main__":
    key = jax.random.PRNGKey(0)
    key, k_img = jax.random.split(key)
    img = jax.random.normal(k_img, (B, C, H, W), jnp.float32)   # NCHW, like torch
    params = init_params(key)
    packed = pack_params(params, C, H, W)        # done once, not per call

    coords, diff_loss, extra = twodim_handpose_forward(img, packed)
    keypoint_uv21 = coords[1]
    jax.block_until_ready(keypoint_uv21)

    assert keypoint_uv21.shape == (B, KEYPOINT_NUM, 2)
    assert keypoint_uv21.dtype == jnp.float32
    # sigmoid output scaled by (w, h) -> u in [0, W], v in [0, H]
    assert bool(jnp.all(keypoint_uv21[..., 0] >= 0) & jnp.all(keypoint_uv21[..., 0] <= W))
    assert bool(jnp.all(keypoint_uv21[..., 1] >= 0) & jnp.all(keypoint_uv21[..., 1] <= H))
    print("KERNEL_OK")
</pallas_src>

<mosaic_0001>
module attributes {stable_mosaic.version = 11 : i64} {
  func.func @kernel(%arg0: i32, %arg1: memref<8x1024xf32, #tpu.memory_space<vmem>>, %arg2: memref<1720x128xf32, #tpu.memory_space<vmem>>, %arg3: memref<8x128xf32, #tpu.memory_space<vmem>>) attributes {dimension_semantics = [#tpu.dimension_semantics<parallel>], iteration_bounds = array<i64: 1>, scalar_prefetch = 0 : i64, scratch_operands = 0 : i64, tpu.core_type = #tpu.core_type<tc>, window_params = [{transform_indices = @transform_0, window_bounds = array<i64: 8, 1024>}, {pipeline_mode = #tpu.pipeline_mode<synchronous>, transform_indices = @transform_1, window_bounds = array<i64: 1720, 128>}, {transform_indices = @transform_2, window_bounds = array<i64: 8, 128>}]} {
    %c0 = arith.constant 0 : index
    %c0_0 = arith.constant 0 : index
    %0 = vector.load %arg1[%c0, %c0_0] : memref<8x1024xf32, #tpu.memory_space<vmem>>, vector<8x1024xf32>
    %c0_1 = arith.constant 0 : index
    %c0_2 = arith.constant 0 : index
    %1 = vector.load %arg2[%c0_1, %c0_2] : memref<1720x128xf32, #tpu.memory_space<vmem>>, vector<1024x128xf32>
    %cst = arith.constant dense<0.000000e+00> : vector<8x128xf32>
    %2 = tpu.matmul %0, %1, %cst {dimension_numbers = #tpu.dot_dimension_numbers<[1], [0], [0], [1], [0, 0, 1, 1], [], []>} : vector<8x1024xf32>, vector<1024x128xf32>, vector<8x128xf32> -> vector<8x128xf32>
    %c1024 = arith.constant 1024 : index
    %c0_3 = arith.constant 0 : index
    %3 = vector.load %arg2[%c1024, %c0_3] : memref<1720x128xf32, #tpu.memory_space<vmem>>, vector<8x128xf32>
    %4 = arith.addf %2, %3 : vector<8x128xf32>
    %c1032 = arith.constant 1032 : index
    %c0_4 = arith.constant 0 : index
    %5 = vector.load %arg2[%c1032, %c0_4] : memref<1720x128xf32, #tpu.memory_space<vmem>>, vector<128x128xf32>
    %cst_5 = arith.constant dense<0.000000e+00> : vector<8x128xf32>
    %6 = tpu.matmul %4, %5, %cst_5 {dimension_numbers = #tpu.dot_dimension_numbers<[1], [0], [0], [1], [0, 0, 1, 1], [], []>} : vector<8x128xf32>, vector<128x128xf32>, vector<8x128xf32> -> vector<8x128xf32>
    %c1160 = arith.constant 1160 : index
    %c0_6 = arith.constant 0 : index
    %7 = vector.load %arg2[%c1160, %c0_6] : memref<1720x128xf32, #tpu.memory_space<vmem>>, vector<8x128xf32>
    %8 = arith.addf %6, %7 : vector<8x128xf32>
    %cst_7 = arith.constant 0.000000e+00 : f32
    %9 = vector.broadcast %cst_7 : f32 to vector<8x128xf32>
    %10 = arith.maximumf %8, %9 : vector<8x128xf32>
    %c1168 = arith.constant 1168 : index
    %c0_8 = arith.constant 0 : index
    %11 = vector.load %arg2[%c1168, %c0_8] : memref<1720x128xf32, #tpu.memory_space<vmem>>, vector<128x128xf32>
    %cst_9 = arith.constant dense<0.000000e+00> : vector<8x128xf32>
    %12 = tpu.matmul %10, %11, %cst_9 {dimension_numbers = #tpu.dot_dimension_numbers<[1], [0], [0], [1], [0, 0, 1, 1], [], []>} : vector<8x128xf32>, vector<128x128xf32>, vector<8x128xf32> -> vector<8x128xf32>
    %c1296 = arith.constant 1296 : index
    %c0_10 = arith.constant 0 : index
    %13 = vector.load %arg2[%c1296, %c0_10] : memref<1720x128xf32, #tpu.memory_space<vmem>>, vector<8x128xf32>
    %14 = arith.addf %12, %13 : vector<8x128xf32>
    %cst_11 = arith.constant 0.000000e+00 : f32
    %15 = vector.broadcast %cst_11 : f32 to vector<8x128xf32>
    %16 = arith.maximumf %14, %15 : vector<8x128xf32>
    %c1304 = arith.constant 1304 : index
    %c0_12 = arith.constant 0 : index
    %17 = vector.load %arg2[%c1304, %c0_12] : memref<1720x128xf32, #tpu.memory_space<vmem>>, vector<128x128xf32>
    %cst_13 = arith.constant dense<0.000000e+00> : vector<8x128xf32>
    %18 = tpu.matmul %16, %17, %cst_13 {dimension_numbers = #tpu.dot_dimension_numbers<[1], [0], [0], [1], [0, 0, 1, 1], [], []>} : vector<8x128xf32>, vector<128x128xf32>, vector<8x128xf32> -> vector<8x128xf32>
    %c1432 = arith.constant 1432 : index
    %c0_14 = arith.constant 0 : index
    %19 = vector.load %arg2[%c1432, %c0_14] : memref<1720x128xf32, #tpu.memory_space<vmem>>, vector<8x128xf32>
    %20 = arith.addf %18, %19 : vector<8x128xf32>
    %cst_15 = arith.constant 0.000000e+00 : f32
    %21 = vector.broadcast %cst_15 : f32 to vector<8x128xf32>
    %22 = arith.maximumf %20, %21 : vector<8x128xf32>
    %c1440 = arith.constant 1440 : index
    %c0_16 = arith.constant 0 : index
    %23 = vector.load %arg2[%c1440, %c0_16] : memref<1720x128xf32, #tpu.memory_space<vmem>>, vector<128x128xf32>
    %cst_17 = arith.constant dense<0.000000e+00> : vector<8x128xf32>
    %24 = tpu.matmul %22, %23, %cst_17 {dimension_numbers = #tpu.dot_dimension_numbers<[1], [0], [0], [1], [0, 0, 1, 1], [], []>} : vector<8x128xf32>, vector<128x128xf32>, vector<8x128xf32> -> vector<8x128xf32>
    %c1568 = arith.constant 1568 : index
    %c0_18 = arith.constant 0 : index
    %25 = vector.load %arg2[%c1568, %c0_18] : memref<1720x128xf32, #tpu.memory_space<vmem>>, vector<8x128xf32>
    %26 = arith.addf %24, %25 : vector<8x128xf32>
    %cst_19 = arith.constant 0.000000e+00 : f32
    %27 = vector.broadcast %cst_19 : f32 to vector<8x128xf32>
    %28 = arith.maximumf %26, %27 : vector<8x128xf32>
    %c1576 = arith.constant 1576 : index
    %c0_20 = arith.constant 0 : index
    %29 = vector.load %arg2[%c1576, %c0_20] : memref<1720x128xf32, #tpu.memory_space<vmem>>, vector<128x128xf32>
    %cst_21 = arith.constant dense<0.000000e+00> : vector<8x128xf32>
    %30 = tpu.matmul %28, %29, %cst_21 {dimension_numbers = #tpu.dot_dimension_numbers<[1], [0], [0], [1], [0, 0, 1, 1], [], []>} : vector<8x128xf32>, vector<128x128xf32>, vector<8x128xf32> -> vector<8x128xf32>
    %c1704 = arith.constant 1704 : index
    %c0_22 = arith.constant 0 : index
    %31 = vector.load %arg2[%c1704, %c0_22] : memref<1720x128xf32, #tpu.memory_space<vmem>>, vector<8x128xf32>
    %32 = arith.addf %30, %31 : vector<8x128xf32>
    %cst_23 = arith.constant 0.000000e+00 : f32
    %33 = vector.broadcast %cst_23 : f32 to vector<8x128xf32>
    %34 = arith.subf %33, %32 : vector<8x128xf32>
    %35 = math.exp %34 : vector<8x128xf32>
    %cst_24 = arith.constant 1.000000e+00 : f32
    %36 = vector.broadcast %cst_24 : f32 to vector<8x128xf32>
    %37 = arith.addf %36, %35 : vector<8x128xf32>
    %38 = tpu.reciprocal %37 {approx = true} : vector<8x128xf32> -> vector<8x128xf32>
    %c1712 = arith.constant 1712 : index
    %c0_25 = arith.constant 0 : index
    %39 = vector.load %arg2[%c1712, %c0_25] : memref<1720x128xf32, #tpu.memory_space<vmem>>, vector<8x128xf32>
    %40 = arith.mulf %38, %39 : vector<8x128xf32>
    %c0_26 = arith.constant 0 : index
    %c0_27 = arith.constant 0 : index
    %41 = vector.load %arg3[%c0_26, %c0_27] : memref<8x128xf32, #tpu.memory_space<vmem>>, vector<8x128xf32>
    tpu.vector_store %arg3[%c0_26, %c0_27], %40 {strides = array<i32>} : memref<8x128xf32, #tpu.memory_space<vmem>>, vector<8x128xf32>,
    return
  }
  func.func @transform_0(%arg0: i32) -> (i32, i32) {
    %c0_i32 = arith.constant 0 : i32
    %c0_i32_0 = arith.constant 0 : i32
    return %arg0, %c0_i32 : i32, i32
  }
  func.func @transform_1(%arg0: i32) -> (i32, i32) {
    %c0_i32 = arith.constant 0 : i32
    %c0_i32_0 = arith.constant 0 : i32
    %c0_i32_1 = arith.constant 0 : i32
    return %c0_i32, %c0_i32_0 : i32, i32
  }
  func.func @transform_2(%arg0: i32) -> (i32, i32) {
    %c0_i32 = arith.constant 0 : i32
    %c0_i32_0 = arith.constant 0 : i32
    return %arg0, %c0_i32 : i32, i32
  }
}

</mosaic_0001>

<llo_original>
// kernel: tpu_custom_call.1
$region0: #{tpu_custom_call.1}
  #allocation0 [shape = 'u32[]', space=smem, size = 0x4, offset = 0x4, fixed_abs, tag = 'smem constant byte address 0x4 - core index']
  #allocation1 [shape = 'u32[144,128]{1,0:T(1,128)}', space=vmem, size = 0x12000, scoped, tag = 'internal scratch']
  %s0 = inlined_call_operand.hbm [shape: f32[8,1024], index: 0, kind: input, shape index: {}]
  %s1 = inlined_call_operand.hbm [shape: f32[1720,128], index: 1, kind: input, shape index: {}]
  %s2 = inlined_call_operand.hbm [shape: f32[8,128], index: 2, kind: output, shape index: {}]
  %s3 = sld [smem:[#allocation0]]
  $region26: #{tpu_custom_call.1} parent=0
    _
  %s5 = ssub.s32 1, %s3
  %s6 = scalar_select 0, %s5, %s3
  $region1: #{tpu_custom_call.1} parent=0
    #allocation2 [shape = 'u8[32768]{0}', space=vmem, size = 0x8000, scoped, tag = 'input window, operand 0, single buffered']
    #allocation3 [shape = 's32[1]{0}', space=sflag, size = 0x4, scoped, tag = 'scoped memory for tpu_custom_call.1']
    #allocation4 [shape = 's32[1]{0}', space=sflag, size = 0x4, scoped, tag = 'scoped memory for tpu_custom_call.1']
    #allocation5 [shape = 'u8[880640]{0}', space=vmem, size = 0xd7000, scoped, tag = 'input window, operand 1, single buffered']
    #allocation6 [shape = 's32[1]{0}', space=sflag, size = 0x4, scoped, tag = 'scoped memory for tpu_custom_call.1']
    #allocation7 [shape = 'u8[4096]{0}', space=vmem, size = 0x1000, scoped, tag = 'output window, operand 0, single buffered']
    %7 = vsyncpa [#allocation3], 0
    %8 = vsyncpa [#allocation6], 0
    %9 = vsyncpa [#allocation4], 0
    // Predicated region
    $region2: #{tpu_custom_call.1} parent=1 // pred_check
      _
    $region3: #{tpu_custom_call.1} parent=1 // pred_check_branch
      %11 = sbr.rel (0) target = $region5
    $region4: #{tpu_custom_call.1} parent=1 // pred_region
      %s13 = ssub.s32 1024, 1024
      %14 = vsyncadd [#allocation3], %s13
      %s16 = sshll.u32 [#allocation2], 4
      %s17 = int_to_ptr.vmem [resolvable:$true] %s16
      %19 = dma.hbm_to_vmem [thread:$0]  %s0, 1024, %s17, [#allocation3]
    $region5: #{tpu_custom_call.1} parent=1 // pred_fallthru
      _
    // Predicated region
    $region6: #{tpu_custom_call.1} parent=1 // pred_check
      _
    $region7: #{tpu_custom_call.1} parent=1 // pred_check_branch
      %21 = sbr.rel (0) target = $region9
    $region8: #{tpu_custom_call.1} parent=1 // pred_region
      %s23 = ssub.s32 27520, 27520
      %24 = vsyncadd [#allocation6], %s23
      %s25 = sshll.u32 [#allocation5], 4
      %s26 = int_to_ptr.vmem [resolvable:$true] %s25
      %31 = dma.hbm_to_vmem [thread:$0]  %s1, 27520, %s26, [#allocation6], 128, 128, 8
    $region9: #{tpu_custom_call.1} parent=1 // pred_fallthru
      _
    // Predicated region
    $region10: #{tpu_custom_call.1} parent=1 // pred_check
      _
    $region11: #{tpu_custom_call.1} parent=1 // pred_check_branch
      %33 = sbr.rel (0) target = $region13
    $region12: #{tpu_custom_call.1} parent=1 // pred_region
      %34 = dma.done [#allocation3], 1024
    $region13: #{tpu_custom_call.1} parent=1 // pred_fallthru
      _
    // Predicated region
    $region14: #{tpu_custom_call.1} parent=1 // pred_check
      _
    $region15: #{tpu_custom_call.1} parent=1 // pred_check_branch
      %36 = sbr.rel (0) target = $region17
    $region16: #{tpu_custom_call.1} parent=1 // pred_region
      %37 = dma.done [#allocation6], 27520
    $region17: #{tpu_custom_call.1} parent=1 // pred_fallthru
      _
    %v38 = vld [vmem:[#allocation2] sm:$0xff]
    %v39 = vld [vmem:[#allocation2 + $0x8] sm:$0xff]
    %v40 = vld [vmem:[#allocation2 + $0x10] sm:$0xff]
    %v41 = vld [vmem:[#allocation2 + $0x18] sm:$0xff]
    %v42 = vld [vmem:[#allocation2 + $0x20] sm:$0xff]
    %v43 = vld [vmem:[#allocation2 + $0x28] sm:$0xff]
    %v44 = vld [vmem:[#allocation2 + $0x30] sm:$0xff]
    %v45 = vld [vmem:[#allocation2 + $0x38] sm:$0xff]
    %v46 = vld [vmem:[#allocation5] sm:$0xff]
    %v47 = vld [vmem:[#allocation5 + $0x8] sm:$0xff]
    %v48 = vld [vmem:[#allocation5 + $0x10] sm:$0xff]
    %v49 = vld [vmem:[#allocation5 + $0x18] sm:$0xff]
    %v50 = vld [vmem:[#allocation5 + $0x20] sm:$0xff]
    %v51 = vld [vmem:[#allocation5 + $0x28] sm:$0xff]
    %v52 = vld [vmem:[#allocation5 + $0x30] sm:$0xff]
    %v53 = vld [vmem:[#allocation5 + $0x38] sm:$0xff]
    %v54 = vld [vmem:[#allocation5 + $0x40] sm:$0xff]
    %v55 = vld [vmem:[#allocation5 + $0x48] sm:$0xff]
    %v56 = vld [vmem:[#allocation5 + $0x50] sm:$0xff]
    %v57 = vld [vmem:[#allocation5 + $0x58] sm:$0xff]
    %v58 = vld [vmem:[#allocation5 + $0x60] sm:$0xff]
    %v59 = vld [vmem:[#allocation5 + $0x68] sm:$0xff]
    %v60 = vld [vmem:[#allocation5 + $0x70] sm:$0xff]
    %v61 = vld [vmem:[#allocation5 + $0x78] sm:$0xff]
    %v62 = vld [vmem:[#allocation5 + $0x80] sm:$0xff]
    %v63 = vld [vmem:[#allocation5 + $0x88] sm:$0xff]
    %v64 = vld [vmem:[#allocation5 + $0x90] sm:$0xff]
    %v65 = vld [vmem:[#allocation5 + $0x98] sm:$0xff]
    %v66 = vld [vmem:[#allocation5 + $0xa0] sm:$0xff]
    %v67 = vld [vmem:[#allocation5 + $0xa8] sm:$0xff]
    %v68 = vld [vmem:[#allocation5 + $0xb0] sm:$0xff]
    %v69 = vld [vmem:[#allocation5 + $0xb8] sm:$0xff]
    %v70 = vld [vmem:[#allocation5 + $0xc0] sm:$0xff]
    %v71 = vld [vmem:[#allocation5 + $0xc8] sm:$0xff]
    %v72 = vld [vmem:[#allocation5 + $0xd0] sm:$0xff]
    %v73 = vld [vmem:[#allocation5 + $0xd8] sm:$0xff]
    %v74 = vld [vmem:[#allocation5 + $0xe0] sm:$0xff]
    %v75 = vld [vmem:[#allocation5 + $0xe8] sm:$0xff]
    %v76 = vld [vmem:[#allocation5 + $0xf0] sm:$0xff]
    %v77 = vld [vmem:[#allocation5 + $0xf8] sm:$0xff]
    %v78 = vld [vmem:[#allocation5 + $0x100] sm:$0xff]
    %v79 = vld [vmem:[#allocation5 + $0x108] sm:$0xff]
    %v80 = vld [vmem:[#allocation5 + $0x110] sm:$0xff]
    %v81 = vld [vmem:[#allocation5 + $0x118] sm:$0xff]
    %v82 = vld [vmem:[#allocation5 + $0x120] sm:$0xff]
    %v83 = vld [vmem:[#allocation5 + $0x128] sm:$0xff]
    %v84 = vld [vmem:[#allocation5 + $0x130] sm:$0xff]
    %v85 = vld [vmem:[#allocation5 + $0x138] sm:$0xff]
    %v86 = vld [vmem:[#allocation5 + $0x140] sm:$0xff]
    %v87 = vld [vmem:[#allocation5 + $0x148] sm:$0xff]
    %v88 = vld [vmem:[#allocation5 + $0x150] sm:$0xff]
    %v89 = vld [vmem:[#allocation5 + $0x158] sm:$0xff]
    %v90 = vld [vmem:[#allocation5 + $0x160] sm:$0xff]
    %v91 = vld [vmem:[#allocation5 + $0x168] sm:$0xff]
    %v92 = vld [vmem:[#allocation5 + $0x170] sm:$0xff]
    %v93 = vld [vmem:[#allocation5 + $0x178] sm:$0xff]
    %v94 = vld [vmem:[#allocation5 + $0x180] sm:$0xff]
    %v95 = vld [vmem:[#allocation5 + $0x188] sm:$0xff]
    %v96 = vld [vmem:[#allocation5 + $0x190] sm:$0xff]
    %v97 = vld [vmem:[#allocation5 + $0x198] sm:$0xff]
    %v98 = vld [vmem:[#allocation5 + $0x1a0] sm:$0xff]
    %v99 = vld [vmem:[#allocation5 + $0x1a8] sm:$0xff]
    %v100 = vld [vmem:[#allocation5 + $0x1b0] sm:$0xff]
    %v101 = vld [vmem:[#allocation5 + $0x1b8] sm:$0xff]
    %v102 = vld [vmem:[#allocation5 + $0x1c0] sm:$0xff]
    %v103 = vld [vmem:[#allocation5 + $0x1c8] sm:$0xff]
    %v104 = vld [vmem:[#allocation5 + $0x1d0] sm:$0xff]
    %v105 = vld [vmem:[#allocation5 + $0x1d8] sm:$0xff]
    %v106 = vld [vmem:[#allocation5 + $0x1e0] sm:$0xff]
    %v107 = vld [vmem:[#allocation5 + $0x1e8] sm:$0xff]
    %v108 = vld [vmem:[#allocation5 + $0x1f0] sm:$0xff]
    %v109 = vld [vmem:[#allocation5 + $0x1f8] sm:$0xff]
    %v110 = vld [vmem:[#allocation5 + $0x200] sm:$0xff]
    %v111 = vld [vmem:[#allocation5 + $0x208] sm:$0xff]
    %v112 = vld [vmem:[#allocation5 + $0x210] sm:$0xff]
    %v113 = vld [vmem:[#allocation5 + $0x218] sm:$0xff]
    %v114 = vld [vmem:[#allocation5 + $0x220] sm:$0xff]
    %v115 = vld [vmem:[#allocation5 + $0x228] sm:$0xff]
    %v116 = vld [vmem:[#allocation5 + $0x230] sm:$0xff]
    %v117 = vld [vmem:[#allocation5 + $0x238] sm:$0xff]
    %v118 = vld [vmem:[#allocation5 + $0x240] sm:$0xff]
    %v119 = vld [vmem:[#allocation5 + $0x248] sm:$0xff]
    %v120 = vld [vmem:[#allocation5 + $0x250] sm:$0xff]
    %v121 = vld [vmem:[#allocation5 + $0x258] sm:$0xff]
    %v122 = vld [vmem:[#allocation5 + $0x260] sm:$0xff]
    %v123 = vld [vmem:[#allocation5 + $0x268] sm:$0xff]
    %v124 = vld [vmem:[#allocation5 + $0x270] sm:$0xff]
    %v125 = vld [vmem:[#allocation5 + $0x278] sm:$0xff]
    %v126 = vld [vmem:[#allocation5 + $0x280] sm:$0xff]
    %v127 = vld [vmem:[#allocation5 + $0x288] sm:$0xff]
    %v128 = vld [vmem:[#allocation5 + $0x290] sm:$0xff]
    %v129 = vld [vmem:[#allocation5 + $0x298] sm:$0xff]
    %v130 = vld [vmem:[#allocation5 + $0x2a0] sm:$0xff]
    %v131 = vld [vmem:[#allocation5 + $0x2a8] sm:$0xff]
    %v132 = vld [vmem:[#allocation5 + $0x2b0] sm:$0xff]
    %v133 = vld [vmem:[#allocation5 + $0x2b8] sm:$0xff]
    %v134 = vld [vmem:[#allocation5 + $0x2c0] sm:$0xff]
    %v135 = vld [vmem:[#allocation5 + $0x2c8] sm:$0xff]
    %v136 = vld [vmem:[#allocation5 + $0x2d0] sm:$0xff]
    %v137 = vld [vmem:[#allocation5 + $0x2d8] sm:$0xff]
    %v138 = vld [vmem:[#allocation5 + $0x2e0] sm:$0xff]
    %v139 = vld [vmem:[#allocation5 + $0x2e8] sm:$0xff]
    %v140 = vld [vmem:[#allocation5 + $0x2f0] sm:$0xff]
    %v141 = vld [vmem:[#allocation5 + $0x2f8] sm:$0xff]
    %v142 = vld [vmem:[#allocation5 + $0x300] sm:$0xff]
    %v143 = vld [vmem:[#allocation5 + $0x308] sm:$0xff]
    %v144 = vld [vmem:[#allocation5 + $0x310] sm:$0xff]
    %v145 = vld [vmem:[#allocation5 + $0x318] sm:$0xff]
    %v146 = vld [vmem:[#allocation5 + $0x320] sm:$0xff]
    %v147 = vld [vmem:[#allocation5 + $0x328] sm:$0xff]
    %v148 = vld [vmem:[#allocation5 + $0x330] sm:$0xff]
    %v149 = vld [vmem:[#allocation5 + $0x338] sm:$0xff]
    %v150 = vld [vmem:[#allocation5 + $0x340] sm:$0xff]
    %v151 = vld [vmem:[#allocation5 + $0x348] sm:$0xff]
    %v152 = vld [vmem:[#allocation5 + $0x350] sm:$0xff]
    %v153 = vld [vmem:[#allocation5 + $0x358] sm:$0xff]
    %v154 = vld [vmem:[#allocation5 + $0x360] sm:$0xff]
    %v155 = vld [vmem:[#allocation5 + $0x368] sm:$0xff]
    %v156 = vld [vmem:[#allocation5 + $0x370] sm:$0xff]
    %v157 = vld [vmem:[#allocation5 + $0x378] sm:$0xff]
    %v158 = vld [vmem:[#allocation5 + $0x380] sm:$0xff]
    %v159 = vld [vmem:[#allocation5 + $0x388] sm:$0xff]
    %v160 = vld [vmem:[#allocation5 + $0x390] sm:$0xff]
    %v161 = vld [vmem:[#allocation5 + $0x398] sm:$0xff]
    %v162 = vld [vmem:[#allocation5 + $0x3a0] sm:$0xff]
    %v163 = vld [vmem:[#allocation5 + $0x3a8] sm:$0xff]
    %v164 = vld [vmem:[#allocation5 + $0x3b0] sm:$0xff]
    %v165 = vld [vmem:[#allocation5 + $0x3b8] sm:$0xff]
    %v166 = vld [vmem:[#allocation5 + $0x3c0] sm:$0xff]
    %v167 = vld [vmem:[#allocation5 + $0x3c8] sm:$0xff]
    %v168 = vld [vmem:[#allocation5 + $0x3d0] sm:$0xff]
    %v169 = vld [vmem:[#allocation5 + $0x3d8] sm:$0xff]
    %v170 = vld [vmem:[#allocation5 + $0x3e0] sm:$0xff]
    %v171 = vld [vmem:[#allocation5 + $0x3e8] sm:$0xff]
    %v172 = vld [vmem:[#allocation5 + $0x3f0] sm:$0xff]
    %v173 = vld [vmem:[#allocation5 + $0x3f8] sm:$0xff]
    %v174 = vld [vmem:[#allocation5 + $0x400] sm:$0xff]
    %175 = vmatprep.subr.mxu0 0.0
    %176 = vmatpush1.msra.mxu0 %v46
    %177 = vmatprep.subr.mxu0 0.0
    %178 = vmatpush1.msra.mxu0 %v47
    %179 = vmatprep.subr.mxu0 0.0
    %180 = vmatpush1.msra.mxu0 %v48
    %181 = vmatprep.subr.mxu0 0.0
    %182 = vmatpush1.msra.mxu0 %v49
    %183 = vmatprep.subr.mxu0 0.0
    %184 = vmatpush1.msra.mxu0 %v50
    %185 = vmatprep.subr.mxu0 0.0
    %186 = vmatpush1.msra.mxu0 %v51
    %187 = vmatprep.subr.mxu0 0.0
    %188 = vmatpush1.msra.mxu0 %v52
    %189 = vmatprep.subr.mxu0 0.0
    %190 = vmatpush1.msra.mxu0 %v53
    %191 = vmatprep.subr.mxu0 0.0
    %192 = vmatpush1.msra.mxu0 %v54
    %193 = vmatprep.subr.mxu0 0.0
    %194 = vmatpush1.msra.mxu0 %v55
    %195 = vmatprep.subr.mxu0 0.0
    %196 = vmatpush1.msra.mxu0 %v56
    %197 = vmatprep.subr.mxu0 0.0
    %198 = vmatpush1.msra.mxu0 %v57
    %199 = vmatprep.subr.mxu0 0.0
    %200 = vmatpush1.msra.mxu0 %v58
    %201 = vmatprep.subr.mxu0 0.0
    %202 = vmatpush1.msra.mxu0 %v59
    %203 = vmatprep.subr.mxu0 0.0
    %204 = vmatpush1.msra.mxu0 %v60
    %205 = vmatprep.subr.mxu0 0.0
    %206 = vmatpush1.msra.mxu0 %v61
    %207 = vmatprep.subr.mxu0 0.0
    %208 = vmatpush1.msra.mxu0 %v62
    %209 = vmatprep.subr.mxu0 0.0
    %210 = vmatpush1.msra.mxu0 %v63
    %211 = vmatprep.subr.mxu0 0.0
    %212 = vmatpush1.msra.mxu0 %v64
    %213 = vmatprep.subr.mxu0 0.0
    %214 = vmatpush1.msra.mxu0 %v65
    %215 = vmatprep.subr.mxu0 0.0
    %216 = vmatpush1.msra.mxu0 %v66
    %217 = vmatprep.subr.mxu0 0.0
    %218 = vmatpush1.msra.mxu0 %v67
    %219 = vmatprep.subr.mxu0 0.0
    %220 = vmatpush1.msra.mxu0 %v68
    %221 = vmatprep.subr.mxu0 0.0
    %222 = vmatpush1.msra.mxu0 %v69
    %223 = vmatprep.subr.mxu0 0.0
    %224 = vmatpush1.msra.mxu0 %v70
    %225 = vmatprep.subr.mxu0 0.0
    %226 = vmatpush1.msra.mxu0 %v71
    %227 = vmatprep.subr.mxu0 0.0
    %228 = vmatpush1.msra.mxu0 %v72
    %229 = vmatprep.subr.mxu0 0.0
    %230 = vmatpush1.msra.mxu0 %v73
    %231 = vmatprep.subr.mxu0 0.0
    %232 = vmatpush1.msra.mxu0 %v74
    %233 = vmatprep.subr.mxu0 0.0
    %234 = vmatpush1.msra.mxu0 %v75
    %235 = vmatprep.subr.mxu0 0.0
    %236 = vmatpush1.msra.mxu0 %v76
    %237 = vmatprep.subr.mxu0 0.0
    %238 = vmatpush1.msra.mxu0 %v77
    %239 = vmatprep.mubr.f32.mxu0 %v39
    %240 = vmatmul.mubr.f32.gmra.mrb[0].mxu0 %v38
    %v241 = vpop.f32.mrb[0].mxu0
    %v242 = vadd.f32 %v174, %v241
    %v243 = vpop.f32.mrb[0].mxu0
    %244 = vdwg.mxu0
    %245 = vmatprep.subr.mxu0 0.0
    %246 = vmatpush1.msra.mxu0 %v78
    %247 = vmatprep.subr.mxu0 0.0
    %248 = vmatpush1.msra.mxu0 %v79
    %249 = vmatprep.subr.mxu0 0.0
    %250 = vmatpush1.msra.mxu0 %v80
    %251 = vmatprep.subr.mxu0 0.0
    %252 = vmatpush1.msra.mxu0 %v81
    %253 = vmatprep.subr.mxu0 0.0
    %254 = vmatpush1.msra.mxu0 %v82
    %255 = vmatprep.subr.mxu0 0.0
    %256 = vmatpush1.msra.mxu0 %v83
    %257 = vmatprep.subr.mxu0 0.0
    %258 = vmatpush1.msra.mxu0 %v84
    %259 = vmatprep.subr.mxu0 0.0
    %260 = vmatpush1.msra.mxu0 %v85
    %261 = vmatprep.subr.mxu0 0.0
    %262 = vmatpush1.msra.mxu0 %v86
    %263 = vmatprep.subr.mxu0 0.0
    %264 = vmatpush1.msra.mxu0 %v87
    %265 = vmatprep.subr.mxu0 0.0
    %266 = vmatpush1.msra.mxu0 %v88
    %267 = vmatprep.subr.mxu0 0.0
    %268 = vmatpush1.msra.mxu0 %v89
    %269 = vmatprep.subr.mxu0 0.0
    %270 = vmatpush1.msra.mxu0 %v90
    %271 = vmatprep.subr.mxu0 0.0
    %272 = vmatpush1.msra.mxu0 %v91
    %273 = vmatprep.subr.mxu0 0.0
    %274 = vmatpush1.msra.mxu0 %v92
    %275 = vmatprep.subr.mxu0 0.0
    %276 = vmatpush1.msra.mxu0 %v93
    %277 = vmatprep.subr.mxu0 0.0
    %278 = vmatpush1.msra.mxu0 %v94
    %279 = vmatprep.subr.mxu0 0.0
    %280 = vmatpush1.msra.mxu0 %v95
    %281 = vmatprep.subr.mxu0 0.0
    %282 = vmatpush1.msra.mxu0 %v96
    %283 = vmatprep.subr.mxu0 0.0
    %284 = vmatpush1.msra.mxu0 %v97
    %285 = vmatprep.subr.mxu0 0.0
    %286 = vmatpush1.msra.mxu0 %v98
    %287 = vmatprep.subr.mxu0 0.0
    %288 = vmatpush1.msra.mxu0 %v99
    %289 = vmatprep.subr.mxu0 0.0
    %290 = vmatpush1.msra.mxu0 %v100
    %291 = vmatprep.subr.mxu0 0.0
    %292 = vmatpush1.msra.mxu0 %v101
    %293 = vmatprep.subr.mxu0 0.0
    %294 = vmatpush1.msra.mxu0 %v102
    %295 = vmatprep.subr.mxu0 0.0
    %296 = vmatpush1.msra.mxu0 %v103
    %297 = vmatprep.subr.mxu0 0.0
    %298 = vmatpush1.msra.mxu0 %v104
    %299 = vmatprep.subr.mxu0 0.0
    %300 = vmatpush1.msra.mxu0 %v105
    %301 = vmatprep.subr.mxu0 0.0
    %302 = vmatpush1.msra.mxu0 %v106
    %303 = vmatprep.subr.mxu0 0.0
    %304 = vmatpush1.msra.mxu0 %v107
    %305 = vmatprep.subr.mxu0 0.0
    %306 = vmatpush1.msra.mxu0 %v108
    %307 = vmatprep.subr.mxu0 0.0
    %308 = vmatpush1.msra.mxu0 %v109
    %309 = vmatprep.mubr.f32.mxu0 %v41
    %310 = vmatmul.mubr.f32.gmra.mrb[0].mxu0 %v40
    %v311 = vpop.f32.mrb[0].mxu0
    %v312 = vadd.f32 %v242, %v311
    %v313 = vpop.f32.mrb[0].mxu0
    %314 = vdwg.mxu0
    %315 = vmatprep.subr.mxu0 0.0
    %316 = vmatpush1.msra.mxu0 %v110
    %317 = vmatprep.subr.mxu0 0.0
    %318 = vmatpush1.msra.mxu0 %v111
    %319 = vmatprep.subr.mxu0 0.0
    %320 = vmatpush1.msra.mxu0 %v112
    %321 = vmatprep.subr.mxu0 0.0
    %322 = vmatpush1.msra.mxu0 %v113
    %323 = vmatprep.subr.mxu0 0.0
    %324 = vmatpush1.msra.mxu0 %v114
    %325 = vmatprep.subr.mxu0 0.0
    %326 = vmatpush1.msra.mxu0 %v115
    %327 = vmatprep.subr.mxu0 0.0
    %328 = vmatpush1.msra.mxu0 %v116
    %329 = vmatprep.subr.mxu0 0.0
    %330 = vmatpush1.msra.mxu0 %v117
    %331 = vmatprep.subr.mxu0 0.0
    %332 = vmatpush1.msra.mxu0 %v118
    %333 = vmatprep.subr.mxu0 0.0
    %334 = vmatpush1.msra.mxu0 %v119
    %335 = vmatprep.subr.mxu0 0.0
    %336 = vmatpush1.msra.mxu0 %v120
    %337 = vmatprep.subr.mxu0 0.0
    %338 = vmatpush1.msra.mxu0 %v121
    %339 = vmatprep.subr.mxu0 0.0
    %340 = vmatpush1.msra.mxu0 %v122
    %341 = vmatprep.subr.mxu0 0.0
    %342 = vmatpush1.msra.mxu0 %v123
    %343 = vmatprep.subr.mxu0 0.0
    %344 = vmatpush1.msra.mxu0 %v124
    %345 = vmatprep.subr.mxu0 0.0
    %346 = vmatpush1.msra.mxu0 %v125
    %347 = vmatprep.subr.mxu0 0.0
    %348 = vmatpush1.msra.mxu0 %v126
    %349 = vmatprep.subr.mxu0 0.0
    %350 = vmatpush1.msra.mxu0 %v127
    %351 = vmatprep.subr.mxu0 0.0
    %352 = vmatpush1.msra.mxu0 %v128
    %353 = vmatprep.subr.mxu0 0.0
    %354 = vmatpush1.msra.mxu0 %v129
    %355 = vmatprep.subr.mxu0 0.0
    %356 = vmatpush1.msra.mxu0 %v130
    %357 = vmatprep.subr.mxu0 0.0
    %358 = vmatpush1.msra.mxu0 %v131
    %359 = vmatprep.subr.mxu0 0.0
    %360 = vmatpush1.msra.mxu0 %v132
    %361 = vmatprep.subr.mxu0 0.0
    %362 = vmatpush1.msra.mxu0 %v133
    %363 = vmatprep.subr.mxu0 0.0
    %364 = vmatpush1.msra.mxu0 %v134
    %365 = vmatprep.subr.mxu0 0.0
    %366 = vmatpush1.msra.mxu0 %v135
    %367 = vmatprep.subr.mxu0 0.0
    %368 = vmatpush1.msra.mxu0 %v136
    %369 = vmatprep.subr.mxu0 0.0
    %370 = vmatpush1.msra.mxu0 %v137
    %371 = vmatprep.subr.mxu0 0.0
    %372 = vmatpush1.msra.mxu0 %v138
    %373 = vmatprep.subr.mxu0 0.0
    %374 = vmatpush1.msra.mxu0 %v139
    %375 = vmatprep.subr.mxu0 0.0
    %376 = vmatpush1.msra.mxu0 %v140
    %377 = vmatprep.subr.mxu0 0.0
    %378 = vmatpush1.msra.mxu0 %v141
    %379 = vmatprep.mubr.f32.mxu0 %v43
    %380 = vmatmul.mubr.f32.gmra.mrb[0].mxu0 %v42
    %v381 = vpop.f32.mrb[0].mxu0
    %v382 = vadd.f32 %v312, %v381
    %v383 = vpop.f32.mrb[0].mxu0
    %384 = vdwg.mxu0
    %385 = vmatprep.subr.mxu0 0.0
    %386 = vmatpush1.msra.mxu0 %v142
    %387 = vmatprep.subr.mxu0 0.0
    %388 = vmatpush1.msra.mxu0 %v143
    %389 = vmatprep.subr.mxu0 0.0
    %390 = vmatpush1.msra.mxu0 %v144
    %391 = vmatprep.subr.mxu0 0.0
    %392 = vmatpush1.msra.mxu0 %v145
    %393 = vmatprep.subr.mxu0 0.0
    %394 = vmatpush1.msra.mxu0 %v146
    %395 = vmatprep.subr.mxu0 0.0
    %396 = vmatpush1.msra.mxu0 %v147
    %397 = vmatprep.subr.mxu0 0.0
    %398 = vmatpush1.msra.mxu0 %v148
    %399 = vmatprep.subr.mxu0 0.0
    %400 = vmatpush1.msra.mxu0 %v149
    %401 = vmatprep.subr.mxu0 0.0
    %402 = vmatpush1.msra.mxu0 %v150
    %403 = vmatprep.subr.mxu0 0.0
    %404 = vmatpush1.msra.mxu0 %v151
    %405 = vmatprep.subr.mxu0 0.0
    %406 = vmatpush1.msra.mxu0 %v152
    %407 = vmatprep.subr.mxu0 0.0
    %408 = vmatpush1.msra.mxu0 %v153
    %409 = vmatprep.subr.mxu0 0.0
    %410 = vmatpush1.msra.mxu0 %v154
    %411 = vmatprep.subr.mxu0 0.0
    %412 = vmatpush1.msra.mxu0 %v155
    %413 = vmatprep.subr.mxu0 0.0
    %414 = vmatpush1.msra.mxu0 %v156
    %415 = vmatprep.subr.mxu0 0.0
    %416 = vmatpush1.msra.mxu0 %v157
    %417 = vmatprep.subr.mxu0 0.0
    %418 = vmatpush1.msra.mxu0 %v158
    %419 = vmatprep.subr.mxu0 0.0
    %420 = vmatpush1.msra.mxu0 %v159
    %421 = vmatprep.subr.mxu0 0.0
    %422 = vmatpush1.msra.mxu0 %v160
    %423 = vmatprep.subr.mxu0 0.0
    %424 = vmatpush1.msra.mxu0 %v161
    %425 = vmatprep.subr.mxu0 0.0
    %426 = vmatpush1.msra.mxu0 %v162
    %427 = vmatprep.subr.mxu0 0.0
    %428 = vmatpush1.msra.mxu0 %v163
    %429 = vmatprep.subr.mxu0 0.0
    %430 = vmatpush1.msra.mxu0 %v164
    %431 = vmatprep.subr.mxu0 0.0
    %432 = vmatpush1.msra.mxu0 %v165
    %433 = vmatprep.subr.mxu0 0.0
    %434 = vmatpush1.msra.mxu0 %v166
    %435 = vmatprep.subr.mxu0 0.0
    %436 = vmatpush1.msra.mxu0 %v167
    %437 = vmatprep.subr.mxu0 0.0
    %438 = vmatpush1.msra.mxu0 %v168
    %439 = vmatprep.subr.mxu0 0.0
    %440 = vmatpush1.msra.mxu0 %v169
    %441 = vmatprep.subr.mxu0 0.0
    %442 = vmatpush1.msra.mxu0 %v170
    %443 = vmatprep.subr.mxu0 0.0
    %444 = vmatpush1.msra.mxu0 %v171
    %445 = vmatprep.subr.mxu0 0.0
    %446 = vmatpush1.msra.mxu0 %v172
    %447 = vmatprep.subr.mxu0 0.0
    %448 = vmatpush1.msra.mxu0 %v173
    %449 = vmatprep.mubr.f32.mxu0 %v45
    %450 = vmatmul.mubr.f32.gmra.mrb[0].mxu0 %v44
    %v451 = vpop.f32.mrb[0].mxu0
    %v452 = vadd.f32 %v382, %v451
    %v453 = vpop.f32.mrb[0].mxu0
    %454 = vdwg.mxu0
    %v455 = vld [vmem:[#allocation5 + $0x408] sm:$0xff]
    %v456 = vld [vmem:[#allocation5 + $0x410] sm:$0xff]
    %v457 = vld [vmem:[#allocation5 + $0x418] sm:$0xff]
    %v458 = vld [vmem:[#allocation5 + $0x420] sm:$0xff]
    %v459 = vld [vmem:[#allocation5 + $0x428] sm:$0xff]
    %v460 = vld [vmem:[#allocation5 + $0x430] sm:$0xff]
    %v461 = vld [vmem:[#allocation5 + $0x438] sm:$0xff]
    %v462 = vld [vmem:[#allocation5 + $0x440] sm:$0xff]
    %v463 = vld [vmem:[#allocation5 + $0x448] sm:$0xff]
    %v464 = vld [vmem:[#allocation5 + $0x450] sm:$0xff]
    %v465 = vld [vmem:[#allocation5 + $0x458] sm:$0xff]
    %v466 = vld [vmem:[#allocation5 + $0x460] sm:$0xff]
    %v467 = vld [vmem:[#allocation5 + $0x468] sm:$0xff]
    %v468 = vld [vmem:[#allocation5 + $0x470] sm:$0xff]
    %v469 = vld [vmem:[#allocation5 + $0x478] sm:$0xff]
    %v470 = vld [vmem:[#allocation5 + $0x480] sm:$0xff]
    %v471 = vld [vmem:[#allocation5 + $0x488] sm:$0xff]
    %472 = vmatprep.subr.mxu0 0.0
    %473 = vmatpush1.msra.mxu0 %v455
    %474 = vmatprep.subr.mxu0 0.0
    %475 = vmatpush1.msra.mxu0 %v456
    %476 = vmatprep.subr.mxu0 0.0
    %477 = vmatpush1.msra.mxu0 %v457
    %478 = vmatprep.subr.mxu0 0.0
    %479 = vmatpush1.msra.mxu0 %v458
    %480 = vmatprep.subr.mxu0 0.0
    %481 = vmatpush1.msra.mxu0 %v459
    %482 = vmatprep.subr.mxu0 0.0
    %483 = vmatpush1.msra.mxu0 %v460
    %484 = vmatprep.subr.mxu0 0.0
    %485 = vmatpush1.msra.mxu0 %v461
    %486 = vmatprep.subr.mxu0 0.0
    %487 = vmatpush1.msra.mxu0 %v462
    %488 = vmatprep.subr.mxu0 0.0
    %489 = vmatpush1.msra.mxu0 %v463
    %490 = vmatprep.subr.mxu0 0.0
    %491 = vmatpush1.msra.mxu0 %v464
    %492 = vmatprep.subr.mxu0 0.0
    %493 = vmatpush1.msra.mxu0 %v465
    %494 = vmatprep.subr.mxu0 0.0
    %495 = vmatpush1.msra.mxu0 %v466
    %496 = vmatprep.subr.mxu0 0.0
    %497 = vmatpush1.msra.mxu0 %v467
    %498 = vmatprep.subr.mxu0 0.0
    %499 = vmatpush1.msra.mxu0 %v468
    %500 = vmatprep.subr.mxu0 0.0
    %501 = vmatpush1.msra.mxu0 %v469
    %502 = vmatprep.subr.mxu0 0.0
    %503 = vmatpush1.msra.mxu0 %v470
    %504 = vmatprep.subr.mxu0 0.0
    %505 = vmatpush1.msra.mxu0 0.0
    %506 = vmatprep.subr.mxu0 0.0
    %507 = vmatpush1.msra.mxu0 0.0
    %508 = vmatprep.subr.mxu0 0.0
    %509 = vmatpush1.msra.mxu0 0.0
    %510 = vmatprep.subr.mxu0 0.0
    %511 = vmatpush1.msra.mxu0 0.0
    %512 = vmatprep.subr.mxu0 0.0
    %513 = vmatpush1.msra.mxu0 0.0
    %514 = vmatprep.subr.mxu0 0.0
    %515 = vmatpush1.msra.mxu0 0.0
    %516 = vmatprep.subr.mxu0 0.0
    %517 = vmatpush1.msra.mxu0 0.0
    %518 = vmatprep.subr.mxu0 0.0
    %519 = vmatpush1.msra.mxu0 0.0
    %520 = vmatprep.subr.mxu0 0.0
    %521 = vmatpush1.msra.mxu0 0.0
    %522 = vmatprep.subr.mxu0 0.0
    %523 = vmatpush1.msra.mxu0 0.0
    %524 = vmatprep.subr.mxu0 0.0
    %525 = vmatpush1.msra.mxu0 0.0
    %526 = vmatprep.subr.mxu0 0.0
    %527 = vmatpush1.msra.mxu0 0.0
    %528 = vmatprep.subr.mxu0 0.0
    %529 = vmatpush1.msra.mxu0 0.0
    %530 = vmatprep.subr.mxu0 0.0
    %531 = vmatpush1.msra.mxu0 0.0
    %532 = vmatprep.subr.mxu0 0.0
    %533 = vmatpush1.msra.mxu0 0.0
    %534 = vmatprep.subr.mxu0 0.0
    %535 = vmatpush1.msra.mxu0 0.0
    %536 = vmatprep.mubr.f32.mxu0 0.0
    %537 = vmatmul.mubr.f32.gmra.mrb[0].mxu0 %v452
    %v538 = vpop.f32.mrb[0].mxu0
    %v539 = vadd.f32 %v471, %v538
    %v540 = vpop.f32.mrb[0].mxu0
    %541 = vdwg.mxu0
    %v542 = vmax.f32 %v539, 0.0
    %v543 = vld [vmem:[#allocation5 + $0x490] sm:$0xff]
    %v544 = vld [vmem:[#allocation5 + $0x498] sm:$0xff]
    %v545 = vld [vmem:[#allocation5 + $0x4a0] sm:$0xff]
    %v546 = vld [vmem:[#allocation5 + $0x4a8] sm:$0xff]
    %v547 = vld [vmem:[#allocation5 + $0x4b0] sm:$0xff]
    %v548 = vld [vmem:[#allocation5 + $0x4b8] sm:$0xff]
    %v549 = vld [vmem:[#allocation5 + $0x4c0] sm:$0xff]
    %v550 = vld [vmem:[#allocation5 + $0x4c8] sm:$0xff]
    %v551 = vld [vmem:[#allocation5 + $0x4d0] sm:$0xff]
    %v552 = vld [vmem:[#allocation5 + $0x4d8] sm:$0xff]
    %v553 = vld [vmem:[#allocation5 + $0x4e0] sm:$0xff]
    %v554 = vld [vmem:[#allocation5 + $0x4e8] sm:$0xff]
    %v555 = vld [vmem:[#allocation5 + $0x4f0] sm:$0xff]
    %v556 = vld [vmem:[#allocation5 + $0x4f8] sm:$0xff]
    %v557 = vld [vmem:[#allocation5 + $0x500] sm:$0xff]
    %v558 = vld [vmem:[#allocation5 + $0x508] sm:$0xff]
    %v559 = vld [vmem:[#allocation5 + $0x510] sm:$0xff]
    %560 = vmatprep.subr.mxu0 0.0
    %561 = vmatpush1.msra.mxu0 %v543
    %562 = vmatprep.subr.mxu0 0.0
    %563 = vmatpush1.msra.mxu0 %v544
    %564 = vmatprep.subr.mxu0 0.0
    %565 = vmatpush1.msra.mxu0 %v545
    %566 = vmatprep.subr.mxu0 0.0
    %567 = vmatpush1.msra.mxu0 %v546
    %568 = vmatprep.subr.mxu0 0.0
    %569 = vmatpush1.msra.mxu0 %v547
    %570 = vmatprep.subr.mxu0 0.0
    %571 = vmatpush1.msra.mxu0 %v548
    %572 = vmatprep.subr.mxu0 0.0
    %573 = vmatpush1.msra.mxu0 %v549
    %574 = vmatprep.subr.mxu0 0.0
    %575 = vmatpush1.msra.mxu0 %v550
    %576 = vmatprep.subr.mxu0 0.0
    %577 = vmatpush1.msra.mxu0 %v551
    %578 = vmatprep.subr.mxu0 0.0
    %579 = vmatpush1.msra.mxu0 %v552
    %580 = vmatprep.subr.mxu0 0.0
    %581 = vmatpush1.msra.mxu0 %v553
    %582 = vmatprep.subr.mxu0 0.0
    %583 = vmatpush1.msra.mxu0 %v554
    %584 = vmatprep.subr.mxu0 0.0
    %585 = vmatpush1.msra.mxu0 %v555
    %586 = vmatprep.subr.mxu0 0.0
    %587 = vmatpush1.msra.mxu0 %v556
    %588 = vmatprep.subr.mxu0 0.0
    %589 = vmatpush1.msra.mxu0 %v557
    %590 = vmatprep.subr.mxu0 0.0
    %591 = vmatpush1.msra.mxu0 %v558
    %592 = vmatprep.subr.mxu0 0.0
    %593 = vmatpush1.msra.mxu0 0.0
    %594 = vmatprep.subr.mxu0 0.0
    %595 = vmatpush1.msra.mxu0 0.0
    %596 = vmatprep.subr.mxu0 0.0
    %597 = vmatpush1.msra.mxu0 0.0
    %598 = vmatprep.subr.mxu0 0.0
    %599 = vmatpush1.msra.mxu0 0.0
    %600 = vmatprep.subr.mxu0 0.0
    %601 = vmatpush1.msra.mxu0 0.0
    %602 = vmatprep.subr.mxu0 0.0
    %603 = vmatpush1.msra.mxu0 0.0
    %604 = vmatprep.subr.mxu0 0.0
    %605 = vmatpush1.msra.mxu0 0.0
    %606 = vmatprep.subr.mxu0 0.0
    %607 = vmatpush1.msra.mxu0 0.0
    %608 = vmatprep.subr.mxu0 0.0
    %609 = vmatpush1.msra.mxu0 0.0
    %610 = vmatprep.subr.mxu0 0.0
    %611 = vmatpush1.msra.mxu0 0.0
    %612 = vmatprep.subr.mxu0 0.0
    %613 = vmatpush1.msra.mxu0 0.0
    %614 = vmatprep.subr.mxu0 0.0
    %615 = vmatpush1.msra.mxu0 0.0
    %616 = vmatprep.subr.mxu0 0.0
    %617 = vmatpush1.msra.mxu0 0.0
    %618 = vmatprep.subr.mxu0 0.0
    %619 = vmatpush1.msra.mxu0 0.0
    %620 = vmatprep.subr.mxu0 0.0
    %621 = vmatpush1.msra.mxu0 0.0
    %622 = vmatprep.subr.mxu0 0.0
    %623 = vmatpush1.msra.mxu0 0.0
    %624 = vmatprep.mubr.f32.mxu0 0.0
    %625 = vmatmul.mubr.f32.gmra.mrb[0].mxu0 %v542
    %v626 = vpop.f32.mrb[0].mxu0
    %v627 = vadd.f32 %v559, %v626
    %v628 = vpop.f32.mrb[0].mxu0
    %629 = vdwg.mxu0
    %v630 = vmax.f32 %v627, 0.0
    %v631 = vld [vmem:[#allocation5 + $0x518] sm:$0xff]
    %v632 = vld [vmem:[#allocation5 + $0x520] sm:$0xff]
    %v633 = vld [vmem:[#allocation5 + $0x528] sm:$0xff]
    %v634 = vld [vmem:[#allocation5 + $0x530] sm:$0xff]
    %v635 = vld [vmem:[#allocation5 + $0x538] sm:$0xff]
    %v636 = vld [vmem:[#allocation5 + $0x540] sm:$0xff]
    %v637 = vld [vmem:[#allocation5 + $0x548] sm:$0xff]
    %v638 = vld [vmem:[#allocation5 + $0x550] sm:$0xff]
    %v639 = vld [vmem:[#allocation5 + $0x558] sm:$0xff]
    %v640 = vld [vmem:[#allocation5 + $0x560] sm:$0xff]
    %v641 = vld [vmem:[#allocation5 + $0x568] sm:$0xff]
    %v642 = vld [vmem:[#allocation5 + $0x570] sm:$0xff]
    %v643 = vld [vmem:[#allocation5 + $0x578] sm:$0xff]
    %v644 = vld [vmem:[#allocation5 + $0x580] sm:$0xff]
    %v645 = vld [vmem:[#allocation5 + $0x588] sm:$0xff]
    %v646 = vld [vmem:[#allocation5 + $0x590] sm:$0xff]
    %v647 = vld [vmem:[#allocation5 + $0x598] sm:$0xff]
    %648 = vmatprep.subr.mxu0 0.0
    %649 = vmatpush1.msra.mxu0 %v631
    %650 = vmatprep.subr.mxu0 0.0
    %651 = vmatpush1.msra.mxu0 %v632
    %652 = vmatprep.subr.mxu0 0.0
    %653 = vmatpush1.msra.mxu0 %v633
    %654 = vmatprep.subr.mxu0 0.0
    %655 = vmatpush1.msra.mxu0 %v634
    %656 = vmatprep.subr.mxu0 0.0
    %657 = vmatpush1.msra.mxu0 %v635
    %658 = vmatprep.subr.mxu0 0.0
    %659 = vmatpush1.msra.mxu0 %v636
    %660 = vmatprep.subr.mxu0 0.0
    %661 = vmatpush1.msra.mxu0 %v637
    %662 = vmatprep.subr.mxu0 0.0
    %663 = vmatpush1.msra.mxu0 %v638
    %664 = vmatprep.subr.mxu0 0.0
    %665 = vmatpush1.msra.mxu0 %v639
    %666 = vmatprep.subr.mxu0 0.0
    %667 = vmatpush1.msra.mxu0 %v640
    %668 = vmatprep.subr.mxu0 0.0
    %669 = vmatpush1.msra.mxu0 %v641
    %670 = vmatprep.subr.mxu0 0.0
    %671 = vmatpush1.msra.mxu0 %v642
    %672 = vmatprep.subr.mxu0 0.0
    %673 = vmatpush1.msra.mxu0 %v643
    %674 = vmatprep.subr.mxu0 0.0
    %675 = vmatpush1.msra.mxu0 %v644
    %676 = vmatprep.subr.mxu0 0.0
    %677 = vmatpush1.msra.mxu0 %v645
    %678 = vmatprep.subr.mxu0 0.0
    %679 = vmatpush1.msra.mxu0 %v646
    %680 = vmatprep.subr.mxu0 0.0
    %681 = vmatpush1.msra.mxu0 0.0
    %682 = vmatprep.subr.mxu0 0.0
    %683 = vmatpush1.msra.mxu0 0.0
    %684 = vmatprep.subr.mxu0 0.0
    %685 = vmatpush1.msra.mxu0 0.0
    %686 = vmatprep.subr.mxu0 0.0
    %687 = vmatpush1.msra.mxu0 0.0
    %688 = vmatprep.subr.mxu0 0.0
    %689 = vmatpush1.msra.mxu0 0.0
    %690 = vmatprep.subr.mxu0 0.0
    %691 = vmatpush1.msra.mxu0 0.0
    %692 = vmatprep.subr.mxu0 0.0
    %693 = vmatpush1.msra.mxu0 0.0
    %694 = vmatprep.subr.mxu0 0.0
    %695 = vmatpush1.msra.mxu0 0.0
    %696 = vmatprep.subr.mxu0 0.0
    %697 = vmatpush1.msra.mxu0 0.0
    %698 = vmatprep.subr.mxu0 0.0
    %699 = vmatpush1.msra.mxu0 0.0
    %700 = vmatprep.subr.mxu0 0.0
    %701 = vmatpush1.msra.mxu0 0.0
    %702 = vmatprep.subr.mxu0 0.0
    %703 = vmatpush1.msra.mxu0 0.0
    %704 = vmatprep.subr.mxu0 0.0
    %705 = vmatpush1.msra.mxu0 0.0
    %706 = vmatprep.subr.mxu0 0.0
    %707 = vmatpush1.msra.mxu0 0.0
    %708 = vmatprep.subr.mxu0 0.0
    %709 = vmatpush1.msra.mxu0 0.0
    %710 = vmatprep.subr.mxu0 0.0
    %711 = vmatpush1.msra.mxu0 0.0
    %712 = vmatprep.mubr.f32.mxu0 0.0
    %713 = vmatmul.mubr.f32.gmra.mrb[0].mxu0 %v630
    %v714 = vpop.f32.mrb[0].mxu0
    %v715 = vadd.f32 %v647, %v714
    %v716 = vpop.f32.mrb[0].mxu0
    %717 = vdwg.mxu0
    %v718 = vmax.f32 %v715, 0.0
    %v719 = vld [vmem:[#allocation5 + $0x5a0] sm:$0xff]
    %v720 = vld [vmem:[#allocation5 + $0x5a8] sm:$0xff]
    %v721 = vld [vmem:[#allocation5 + $0x5b0] sm:$0xff]
    %v722 = vld [vmem:[#allocation5 + $0x5b8] sm:$0xff]
    %v723 = vld [vmem:[#allocation5 + $0x5c0] sm:$0xff]
    %v724 = vld [vmem:[#allocation5 + $0x5c8] sm:$0xff]
    %v725 = vld [vmem:[#allocation5 + $0x5d0] sm:$0xff]
    %v726 = vld [vmem:[#allocation5 + $0x5d8] sm:$0xff]
    %v727 = vld [vmem:[#allocation5 + $0x5e0] sm:$0xff]
    %v728 = vld [vmem:[#allocation5 + $0x5e8] sm:$0xff]
    %v729 = vld [vmem:[#allocation5 + $0x5f0] sm:$0xff]
    %v730 = vld [vmem:[#allocation5 + $0x5f8] sm:$0xff]
    %v731 = vld [vmem:[#allocation5 + $0x600] sm:$0xff]
    %v732 = vld [vmem:[#allocation5 + $0x608] sm:$0xff]
    %v733 = vld [vmem:[#allocation5 + $0x610] sm:$0xff]
    %v734 = vld [vmem:[#allocation5 + $0x618] sm:$0xff]
    %v735 = vld [vmem:[#allocation5 + $0x620] sm:$0xff]
    %736 = vmatprep.subr.mxu0 0.0
    %737 = vmatpush1.msra.mxu0 %v719
    %738 = vmatprep.subr.mxu0 0.0
    %739 = vmatpush1.msra.mxu0 %v720
    %740 = vmatprep.subr.mxu0 0.0
    %741 = vmatpush1.msra.mxu0 %v721
    %742 = vmatprep.subr.mxu0 0.0
    %743 = vmatpush1.msra.mxu0 %v722
    %744 = vmatprep.subr.mxu0 0.0
    %745 = vmatpush1.msra.mxu0 %v723
    %746 = vmatprep.subr.mxu0 0.0
    %747 = vmatpush1.msra.mxu0 %v724
    %748 = vmatprep.subr.mxu0 0.0
    %749 = vmatpush1.msra.mxu0 %v725
    %750 = vmatprep.subr.mxu0 0.0
    %751 = vmatpush1.msra.mxu0 %v726
    %752 = vmatprep.subr.mxu0 0.0
    %753 = vmatpush1.msra.mxu0 %v727
    %754 = vmatprep.subr.mxu0 0.0
    %755 = vmatpush1.msra.mxu0 %v728
    %756 = vmatprep.subr.mxu0 0.0
    %757 = vmatpush1.msra.mxu0 %v729
    %758 = vmatprep.subr.mxu0 0.0
    %759 = vmatpush1.msra.mxu0 %v730
    %760 = vmatprep.subr.mxu0 0.0
    %761 = vmatpush1.msra.mxu0 %v731
    %762 = vmatprep.subr.mxu0 0.0
    %763 = vmatpush1.msra.mxu0 %v732
    %764 = vmatprep.subr.mxu0 0.0
    %765 = vmatpush1.msra.mxu0 %v733
    %766 = vmatprep.subr.mxu0 0.0
    %767 = vmatpush1.msra.mxu0 %v734
    %768 = vmatprep.subr.mxu0 0.0
    %769 = vmatpush1.msra.mxu0 0.0
    %770 = vmatprep.subr.mxu0 0.0
    %771 = vmatpush1.msra.mxu0 0.0
    %772 = vmatprep.subr.mxu0 0.0
    %773 = vmatpush1.msra.mxu0 0.0
    %774 = vmatprep.subr.mxu0 0.0
    %775 = vmatpush1.msra.mxu0 0.0
    %776 = vmatprep.subr.mxu0 0.0
    %777 = vmatpush1.msra.mxu0 0.0
    %778 = vmatprep.subr.mxu0 0.0
    %779 = vmatpush1.msra.mxu0 0.0
    %780 = vmatprep.subr.mxu0 0.0
    %781 = vmatpush1.msra.mxu0 0.0
    %782 = vmatprep.subr.mxu0 0.0
    %783 = vmatpush1.msra.mxu0 0.0
    %784 = vmatprep.subr.mxu0 0.0
    %785 = vmatpush1.msra.mxu0 0.0
    %786 = vmatprep.subr.mxu0 0.0
    %787 = vmatpush1.msra.mxu0 0.0
    %788 = vmatprep.subr.mxu0 0.0
    %789 = vmatpush1.msra.mxu0 0.0
    %790 = vmatprep.subr.mxu0 0.0
    %791 = vmatpush1.msra.mxu0 0.0
    %792 = vmatprep.subr.mxu0 0.0
    %793 = vmatpush1.msra.mxu0 0.0
    %794 = vmatprep.subr.mxu0 0.0
    %795 = vmatpush1.msra.mxu0 0.0
    %796 = vmatprep.subr.mxu0 0.0
    %797 = vmatpush1.msra.mxu0 0.0
    %798 = vmatprep.subr.mxu0 0.0
    %799 = vmatpush1.msra.mxu0 0.0
    %800 = vmatprep.mubr.f32.mxu0 0.0
    %801 = vmatmul.mubr.f32.gmra.mrb[0].mxu0 %v718
    %v802 = vpop.f32.mrb[0].mxu0
    %v803 = vadd.f32 %v735, %v802
    %v804 = vpop.f32.mrb[0].mxu0
    %805 = vdwg.mxu0
    %v806 = vmax.f32 %v803, 0.0
    %v807 = vld [vmem:[#allocation5 + $0x628] sm:$0xff]
    %v808 = vld [vmem:[#allocation5 + $0x630] sm:$0xff]
    %v809 = vld [vmem:[#allocation5 + $0x638] sm:$0xff]
    %v810 = vld [vmem:[#allocation5 + $0x640] sm:$0xff]
    %v811 = vld [vmem:[#allocation5 + $0x648] sm:$0xff]
    %v812 = vld [vmem:[#allocation5 + $0x650] sm:$0xff]
    %v813 = vld [vmem:[#allocation5 + $0x658] sm:$0xff]
    %v814 = vld [vmem:[#allocation5 + $0x660] sm:$0xff]
    %v815 = vld [vmem:[#allocation5 + $0x668] sm:$0xff]
    %v816 = vld [vmem:[#allocation5 + $0x670] sm:$0xff]
    %v817 = vld [vmem:[#allocation5 + $0x678] sm:$0xff]
    %v818 = vld [vmem:[#allocation5 + $0x680] sm:$0xff]
    %v819 = vld [vmem:[#allocation5 + $0x688] sm:$0xff]
    %v820 = vld [vmem:[#allocation5 + $0x690] sm:$0xff]
    %v821 = vld [vmem:[#allocation5 + $0x698] sm:$0xff]
    %v822 = vld [vmem:[#allocation5 + $0x6a0] sm:$0xff]
    %v823 = vld [vmem:[#allocation5 + $0x6a8] sm:$0xff]
    %824 = vmatprep.subr.mxu0 0.0
    %825 = vmatpush1.msra.mxu0 %v807
    %826 = vmatprep.subr.mxu0 0.0
    %827 = vmatpush1.msra.mxu0 %v808
    %828 = vmatprep.subr.mxu0 0.0
    %829 = vmatpush1.msra.mxu0 %v809
    %830 = vmatprep.subr.mxu0 0.0
    %831 = vmatpush1.msra.mxu0 %v810
    %832 = vmatprep.subr.mxu0 0.0
    %833 = vmatpush1.msra.mxu0 %v811
    %834 = vmatprep.subr.mxu0 0.0
    %835 = vmatpush1.msra.mxu0 %v812
    %836 = vmatprep.subr.mxu0 0.0
    %837 = vmatpush1.msra.mxu0 %v813
    %838 = vmatprep.subr.mxu0 0.0
    %839 = vmatpush1.msra.mxu0 %v814
    %840 = vmatprep.subr.mxu0 0.0
    %841 = vmatpush1.msra.mxu0 %v815
    %842 = vmatprep.subr.mxu0 0.0
    %843 = vmatpush1.msra.mxu0 %v816
    %844 = vmatprep.subr.mxu0 0.0
    %845 = vmatpush1.msra.mxu0 %v817
    %846 = vmatprep.subr.mxu0 0.0
    %847 = vmatpush1.msra.mxu0 %v818
    %848 = vmatprep.subr.mxu0 0.0
    %849 = vmatpush1.msra.mxu0 %v819
    %850 = vmatprep.subr.mxu0 0.0
    %851 = vmatpush1.msra.mxu0 %v820
    %852 = vmatprep.subr.mxu0 0.0
    %853 = vmatpush1.msra.mxu0 %v821
    %854 = vmatprep.subr.mxu0 0.0
    %855 = vmatpush1.msra.mxu0 %v822
    %856 = vmatprep.subr.mxu0 0.0
    %857 = vmatpush1.msra.mxu0 0.0
    %858 = vmatprep.subr.mxu0 0.0
    %859 = vmatpush1.msra.mxu0 0.0
    %860 = vmatprep.subr.mxu0 0.0
    %861 = vmatpush1.msra.mxu0 0.0
    %862 = vmatprep.subr.mxu0 0.0
    %863 = vmatpush1.msra.mxu0 0.0
    %864 = vmatprep.subr.mxu0 0.0
    %865 = vmatpush1.msra.mxu0 0.0
    %866 = vmatprep.subr.mxu0 0.0
    %867 = vmatpush1.msra.mxu0 0.0
    %868 = vmatprep.subr.mxu0 0.0
    %869 = vmatpush1.msra.mxu0 0.0
    %870 = vmatprep.subr.mxu0 0.0
    %871 = vmatpush1.msra.mxu0 0.0
    %872 = vmatprep.subr.mxu0 0.0
    %873 = vmatpush1.msra.mxu0 0.0
    %874 = vmatprep.subr.mxu0 0.0
    %875 = vmatpush1.msra.mxu0 0.0
    %876 = vmatprep.subr.mxu0 0.0
    %877 = vmatpush1.msra.mxu0 0.0
    %878 = vmatprep.subr.mxu0 0.0
    %879 = vmatpush1.msra.mxu0 0.0
    %880 = vmatprep.subr.mxu0 0.0
    %881 = vmatpush1.msra.mxu0 0.0
    %882 = vmatprep.subr.mxu0 0.0
    %883 = vmatpush1.msra.mxu0 0.0
    %884 = vmatprep.subr.mxu0 0.0
    %885 = vmatpush1.msra.mxu0 0.0
    %886 = vmatprep.subr.mxu0 0.0
    %887 = vmatpush1.msra.mxu0 0.0
    %888 = vmatprep.mubr.f32.mxu0 0.0
    %889 = vmatmul.mubr.f32.gmra.mrb[0].mxu0 %v806
    %v890 = vpop.f32.mrb[0].mxu0
    %v891 = vadd.f32 %v823, %v890
    %v892 = vpop.f32.mrb[0].mxu0
    %893 = vdwg.mxu0
    %v894 = vsub.f32 0.0, %v891
    %v895 = vmul.f32 %v894, 1.442695
    %v896 = vpow.pop %v895
    %v897 = vadd.f32 %v896, 1.0
    %v898 = vrcp.pop %v897
    %v899 = vld [vmem:[#allocation5 + $0x6b0] sm:$0xff]
    %v900 = vmul.f32 %v898, %v899
    %901 = vst [vmem:[#allocation7] sm:$0xff] %v900
    // Predicated region
    $region18: #{tpu_custom_call.1} parent=1 // pred_check
      _
    $region19: #{tpu_custom_call.1} parent=1 // pred_check_branch
      %903 = sbr.rel (0) target = $region21
    $region20: #{tpu_custom_call.1} parent=1 // pred_region
      %s905 = ssub.s32 128, 128
      %906 = vsyncadd [#allocation4], %s905
      %s908 = sshll.u32 [#allocation7], 4
      %s909 = int_to_ptr.vmem [resolvable:$true] %s908
      %911 = dma.vmem_to_hbm [thread:$0]  %s909, 128, %s2, [#allocation4]
    $region21: #{tpu_custom_call.1} parent=1 // pred_fallthru
      _
    // Predicated region
    $region22: #{tpu_custom_call.1} parent=1 // pred_check
      _
    $region23: #{tpu_custom_call.1} parent=1 // pred_check_branch
      %913 = sbr.rel (0) target = $region25
    $region24: #{tpu_custom_call.1} parent=1 // pred_region
      %914 = dma.done [#allocation4], 128
    $region25: #{tpu_custom_call.1} parent=1 // pred_fallthru
      _
    %915 = vsyncpa [#allocation3], 1
    %916 = vsyncpa [#allocation6], 1
    %917 = vsyncpa [#allocation4], 1

</llo_original>
